<compile_context>
chip_gen: v7x
topology: tpu7x:2x2x1
jax: 0.10.0
libtpu: 0.0.40
codegen_flags: <defaults>
</compile_context>

<pallas_src>
import jax
import jax.numpy as jnp
from jax.experimental import pallas as pl
from jax.experimental.pallas import tpu as pltpu


def _conv1x1_kernel(w_ref, b_ref, x_ref, o_ref):
    """Per-voxel channel mixing on the VPU.

    w_ref : (Cout, Cin)        SMEM (scalar reads)
    b_ref : (Cout,)            SMEM
    x_ref : (NB, Cin, RT, L)   VMEM, dense (sublane, lane) voxel plane
    o_ref : (NB, Cout, RT, L)  VMEM
    """
    nb, cin = x_ref.shape[0], x_ref.shape[1]
    cout = o_ref.shape[1]
    for n in range(nb):
        # Load each input-channel plane once; reuse across all Cout outputs.
        xs = [x_ref[n, ci].astype(jnp.float32) for ci in range(cin)]
        for co in range(cout):
            acc = xs[0] * w_ref[co, 0]
            for ci in range(1, cin):
                acc = acc + xs[ci] * w_ref[co, ci]
            o_ref[n, co] = (acc + b_ref[co]).astype(o_ref.dtype)


def _pick_lane_width(S):
    """Largest lane width (multiple of 128) dividing S, preferring >= 8 rows."""
    for L in (1024, 512, 256, 128):
        if S % L == 0 and S // L >= 8:
            return L
    for L in (1024, 512, 256, 128):
        if S % L == 0:
            return L
    # Fallback: whole voxel axis on lanes (full-dim block is always legal).
    # TODO(synk): for huge volumes with S not a multiple of 128, pad S instead.
    return S


def conv3d_1x1(x_ncdhw, weight, bias, *,
               target_tile_voxels=256 * 1024,
               vmem_limit_bytes=32 * 1024 * 1024):
    """1x1x1 Conv3d forward (PyTorch `Out` module).

    x_ncdhw : (N, Cin, D, H, W)
    weight  : (Cout, Cin) or (Cout, Cin, 1, 1, 1)
    bias    : (Cout,)
    returns : (N, Cout, D, H, W)
    """
    N, Cin, D, H, W = x_ncdhw.shape
    S = D * H * W
    Cout = weight.shape[0]

    w_mat = weight.reshape(Cout, Cin).astype(jnp.float32)
    b_vec = bias.reshape(Cout).astype(jnp.float32)

    # Free, layout-preserving reshape: NCDHW -> (N, Cin, R, L), lane-dense L.
    L = _pick_lane_width(S)
    R = S // L
    x4 = x_ncdhw.reshape(N, Cin, R, L)

    # Batch folding for small volumes: largest divisor of N whose per-step
    # voxel count stays under the target tile size.
    nb = 1
    for cand in range(min(N, max(1, target_tile_voxels // S)), 0, -1):
        if N % cand == 0:
            nb = cand
            break

    # Rows per step: a multiple of 8 sublanes, or the full row axis.
    rt = max(8, (target_tile_voxels // (L * nb) // 8) * 8)
    if rt >= R:
        rt = R

    grid = (N // nb, pl.cdiv(R, rt))

    itemsize = jnp.dtype(x_ncdhw.dtype).itemsize
    flops = 2 * N * S * Cin * Cout
    bytes_accessed = (N * S * Cin * itemsize + N * S * Cout * itemsize
                      + (Cin * Cout + Cout) * 4)

    out4 = pl.pallas_call(
        _conv1x1_kernel,
        out_shape=jax.ShapeDtypeStruct((N, Cout, R, L), x_ncdhw.dtype),
        grid_spec=pltpu.PrefetchScalarGridSpec(
            num_scalar_prefetch=0,
            grid=grid,
            in_specs=[
                pl.BlockSpec(memory_space=pltpu.MemorySpace.SMEM),   # weight
                pl.BlockSpec(memory_space=pltpu.MemorySpace.SMEM),   # bias
                pl.BlockSpec((nb, Cin, rt, L), lambda n, r: (n, 0, r, 0)),
            ],
            out_specs=pl.BlockSpec((nb, Cout, rt, L), lambda n, r: (n, 0, r, 0)),
        ),
        compiler_params=pltpu.CompilerParams(
            dimension_semantics=("parallel", "parallel"),
            vmem_limit_bytes=vmem_limit_bytes,
        ),
        cost_estimate=pl.CostEstimate(
            flops=flops, transcendentals=0, bytes_accessed=bytes_accessed),
    )(w_mat, b_vec, x4)

    # Free reshape back to NCDHW.
    return out4.reshape(N, Cout, D, H, W)


if __name__ == "__main__":
    key = jax.random.PRNGKey(0)
    k_x, k_w, k_b = jax.random.split(key, 3)

    # Shapes consistent with the module: Out(in_channels=4, out_channels=3).
    N, Cin, Cout, D, H, W = 2, 4, 3, 8, 8, 8

    x = jax.random.normal(k_x, (N, Cin, D, H, W), dtype=jnp.float32)
    # Conv3d weight has shape (Cout, Cin, 1, 1, 1).
    weight = jax.random.normal(k_w, (Cout, Cin, 1, 1, 1), dtype=jnp.float32) * 0.1
    bias = jax.random.normal(k_b, (Cout,), dtype=jnp.float32) * 0.1

    out = conv3d_1x1(x, weight, bias)
    out = jax.block_until_ready(out)

    # Reference (plain JAX) check of the 1x1x1 conv semantics.
    ref = (jnp.einsum("ncdhw,oc->nodhw", x, weight.reshape(Cout, Cin))
           + bias[None, :, None, None, None])
    assert out.shape == (N, Cout, D, H, W)
    assert jnp.allclose(out, ref, atol=1e-5, rtol=1e-5)

    print("KERNEL_OK")
</pallas_src>

<mosaic_0001>
module attributes {stable_mosaic.version = 11 : i64} {
  func.func @_conv1x1_kernel(%arg0: i32, %arg1: i32, %arg2: memref<3x4xf32, #tpu.memory_space<smem>>, %arg3: memref<3xf32, #tpu.memory_space<smem>>, %arg4: memref<2x4x1x512xf32, #tpu.memory_space<vmem>>, %arg5: memref<2x3x1x512xf32, #tpu.memory_space<vmem>>) attributes {dimension_semantics = [#tpu.dimension_semantics<parallel>, #tpu.dimension_semantics<parallel>], iteration_bounds = array<i64: 1, 1>, scalar_prefetch = 0 : i64, scratch_operands = 0 : i64, tpu.core_type = #tpu.core_type<tc>, window_params = [{transform_indices = @transform_0, window_bounds = array<i64: 3, 4>}, {transform_indices = @transform_1, window_bounds = array<i64: 3>}, {transform_indices = @transform_2, window_bounds = array<i64: 2, 4, 1, 512>}, {transform_indices = @transform_3, window_bounds = array<i64: 2, 3, 1, 512>}]} {
    %c0 = arith.constant 0 : index
    %c0_0 = arith.constant 0 : index
    %c0_1 = arith.constant 0 : index
    %c0_2 = arith.constant 0 : index
    %0 = vector.load %arg4[%c0, %c0_0, %c0_1, %c0_2] : memref<2x4x1x512xf32, #tpu.memory_space<vmem>>, vector<1x1x1x512xf32>
    %1 = vector.shape_cast %0 : vector<1x1x1x512xf32> to vector<1x512xf32>
    %c0_3 = arith.constant 0 : index
    %c1 = arith.constant 1 : index
    %c0_4 = arith.constant 0 : index
    %c0_5 = arith.constant 0 : index
    %2 = vector.load %arg4[%c0_3, %c1, %c0_4, %c0_5] : memref<2x4x1x512xf32, #tpu.memory_space<vmem>>, vector<1x1x1x512xf32>
    %3 = vector.shape_cast %2 : vector<1x1x1x512xf32> to vector<1x512xf32>
    %c0_6 = arith.constant 0 : index
    %c2 = arith.constant 2 : index
    %c0_7 = arith.constant 0 : index
    %c0_8 = arith.constant 0 : index
    %4 = vector.load %arg4[%c0_6, %c2, %c0_7, %c0_8] : memref<2x4x1x512xf32, #tpu.memory_space<vmem>>, vector<1x1x1x512xf32>
    %5 = vector.shape_cast %4 : vector<1x1x1x512xf32> to vector<1x512xf32>
    %c0_9 = arith.constant 0 : index
    %c3 = arith.constant 3 : index
    %c0_10 = arith.constant 0 : index
    %c0_11 = arith.constant 0 : index
    %6 = vector.load %arg4[%c0_9, %c3, %c0_10, %c0_11] : memref<2x4x1x512xf32, #tpu.memory_space<vmem>>, vector<1x1x1x512xf32>
    %7 = vector.shape_cast %6 : vector<1x1x1x512xf32> to vector<1x512xf32>
    %c0_12 = arith.constant 0 : index
    %c0_13 = arith.constant 0 : index
    %8 = memref.load %arg2[%c0_12, %c0_13] : memref<3x4xf32, #tpu.memory_space<smem>>
    %9 = vector.broadcast %8 : f32 to vector<1x512xf32>
    %10 = arith.mulf %1, %9 : vector<1x512xf32>
    %c0_14 = arith.constant 0 : index
    %c1_15 = arith.constant 1 : index
    %11 = memref.load %arg2[%c0_14, %c1_15] : memref<3x4xf32, #tpu.memory_space<smem>>
    %12 = vector.broadcast %11 : f32 to vector<1x512xf32>
    %13 = arith.mulf %3, %12 : vector<1x512xf32>
    %14 = arith.addf %10, %13 : vector<1x512xf32>
    %c0_16 = arith.constant 0 : index
    %c2_17 = arith.constant 2 : index
    %15 = memref.load %arg2[%c0_16, %c2_17] : memref<3x4xf32, #tpu.memory_space<smem>>
    %16 = vector.broadcast %15 : f32 to vector<1x512xf32>
    %17 = arith.mulf %5, %16 : vector<1x512xf32>
    %18 = arith.addf %14, %17 : vector<1x512xf32>
    %c0_18 = arith.constant 0 : index
    %c3_19 = arith.constant 3 : index
    %19 = memref.load %arg2[%c0_18, %c3_19] : memref<3x4xf32, #tpu.memory_space<smem>>
    %20 = vector.broadcast %19 : f32 to vector<1x512xf32>
    %21 = arith.mulf %7, %20 : vector<1x512xf32>
    %22 = arith.addf %18, %21 : vector<1x512xf32>
    %c0_20 = arith.constant 0 : index
    %23 = memref.load %arg3[%c0_20] : memref<3xf32, #tpu.memory_space<smem>>
    %24 = vector.broadcast %23 : f32 to vector<1x512xf32>
    %25 = arith.addf %22, %24 : vector<1x512xf32>
    %c0_21 = arith.constant 0 : index
    %c0_22 = arith.constant 0 : index
    %c0_23 = arith.constant 0 : index
    %c0_24 = arith.constant 0 : index
    %26 = vector.load %arg5[%c0_21, %c0_22, %c0_23, %c0_24] : memref<2x3x1x512xf32, #tpu.memory_space<vmem>>, vector<1x1x1x512xf32>
    %27 = vector.shape_cast %26 : vector<1x1x1x512xf32> to vector<1x512xf32>
    %28 = vector.shape_cast %25 : vector<1x512xf32> to vector<1x1x1x512xf32>
    tpu.vector_store %arg5[%c0_21, %c0_22, %c0_23, %c0_24], %28 {strides = array<i32>} : memref<2x3x1x512xf32, #tpu.memory_space<vmem>>, vector<1x1x1x512xf32>,
    %c1_25 = arith.constant 1 : index
    %c0_26 = arith.constant 0 : index
    %29 = memref.load %arg2[%c1_25, %c0_26] : memref<3x4xf32, #tpu.memory_space<smem>>
    %30 = vector.broadcast %29 : f32 to vector<1x512xf32>
    %31 = arith.mulf %1, %30 : vector<1x512xf32>
    %c1_27 = arith.constant 1 : index
    %c1_28 = arith.constant 1 : index
    %32 = memref.load %arg2[%c1_27, %c1_28] : memref<3x4xf32, #tpu.memory_space<smem>>
    %33 = vector.broadcast %32 : f32 to vector<1x512xf32>
    %34 = arith.mulf %3, %33 : vector<1x512xf32>
    %35 = arith.addf %31, %34 : vector<1x512xf32>
    %c1_29 = arith.constant 1 : index
    %c2_30 = arith.constant 2 : index
    %36 = memref.load %arg2[%c1_29, %c2_30] : memref<3x4xf32, #tpu.memory_space<smem>>
    %37 = vector.broadcast %36 : f32 to vector<1x512xf32>
    %38 = arith.mulf %5, %37 : vector<1x512xf32>
    %39 = arith.addf %35, %38 : vector<1x512xf32>
    %c1_31 = arith.constant 1 : index
    %c3_32 = arith.constant 3 : index
    %40 = memref.load %arg2[%c1_31, %c3_32] : memref<3x4xf32, #tpu.memory_space<smem>>
    %41 = vector.broadcast %40 : f32 to vector<1x512xf32>
    %42 = arith.mulf %7, %41 : vector<1x512xf32>
    %43 = arith.addf %39, %42 : vector<1x512xf32>
    %c1_33 = arith.constant 1 : index
    %44 = memref.load %arg3[%c1_33] : memref<3xf32, #tpu.memory_space<smem>>
    %45 = vector.broadcast %44 : f32 to vector<1x512xf32>
    %46 = arith.addf %43, %45 : vector<1x512xf32>
    %c0_34 = arith.constant 0 : index
    %c1_35 = arith.constant 1 : index
    %c0_36 = arith.constant 0 : index
    %c0_37 = arith.constant 0 : index
    %47 = vector.load %arg5[%c0_34, %c1_35, %c0_36, %c0_37] : memref<2x3x1x512xf32, #tpu.memory_space<vmem>>, vector<1x1x1x512xf32>
    %48 = vector.shape_cast %47 : vector<1x1x1x512xf32> to vector<1x512xf32>
    %49 = vector.shape_cast %46 : vector<1x512xf32> to vector<1x1x1x512xf32>
    tpu.vector_store %arg5[%c0_34, %c1_35, %c0_36, %c0_37], %49 {strides = array<i32>} : memref<2x3x1x512xf32, #tpu.memory_space<vmem>>, vector<1x1x1x512xf32>,
    %c2_38 = arith.constant 2 : index
    %c0_39 = arith.constant 0 : index
    %50 = memref.load %arg2[%c2_38, %c0_39] : memref<3x4xf32, #tpu.memory_space<smem>>
    %51 = vector.broadcast %50 : f32 to vector<1x512xf32>
    %52 = arith.mulf %1, %51 : vector<1x512xf32>
    %c2_40 = arith.constant 2 : index
    %c1_41 = arith.constant 1 : index
    %53 = memref.load %arg2[%c2_40, %c1_41] : memref<3x4xf32, #tpu.memory_space<smem>>
    %54 = vector.broadcast %53 : f32 to vector<1x512xf32>
    %55 = arith.mulf %3, %54 : vector<1x512xf32>
    %56 = arith.addf %52, %55 : vector<1x512xf32>
    %c2_42 = arith.constant 2 : index
    %c2_43 = arith.constant 2 : index
    %57 = memref.load %arg2[%c2_42, %c2_43] : memref<3x4xf32, #tpu.memory_space<smem>>
    %58 = vector.broadcast %57 : f32 to vector<1x512xf32>
    %59 = arith.mulf %5, %58 : vector<1x512xf32>
    %60 = arith.addf %56, %59 : vector<1x512xf32>
    %c2_44 = arith.constant 2 : index
    %c3_45 = arith.constant 3 : index
    %61 = memref.load %arg2[%c2_44, %c3_45] : memref<3x4xf32, #tpu.memory_space<smem>>
    %62 = vector.broadcast %61 : f32 to vector<1x512xf32>
    %63 = arith.mulf %7, %62 : vector<1x512xf32>
    %64 = arith.addf %60, %63 : vector<1x512xf32>
    %c2_46 = arith.constant 2 : index
    %65 = memref.load %arg3[%c2_46] : memref<3xf32, #tpu.memory_space<smem>>
    %66 = vector.broadcast %65 : f32 to vector<1x512xf32>
    %67 = arith.addf %64, %66 : vector<1x512xf32>
    %c0_47 = arith.constant 0 : index
    %c2_48 = arith.constant 2 : index
    %c0_49 = arith.constant 0 : index
    %c0_50 = arith.constant 0 : index
    %68 = vector.load %arg5[%c0_47, %c2_48, %c0_49, %c0_50] : memref<2x3x1x512xf32, #tpu.memory_space<vmem>>, vector<1x1x1x512xf32>
    %69 = vector.shape_cast %68 : vector<1x1x1x512xf32> to vector<1x512xf32>
    %70 = vector.shape_cast %67 : vector<1x512xf32> to vector<1x1x1x512xf32>
    tpu.vector_store %arg5[%c0_47, %c2_48, %c0_49, %c0_50], %70 {strides = array<i32>} : memref<2x3x1x512xf32, #tpu.memory_space<vmem>>, vector<1x1x1x512xf32>,
    %c1_51 = arith.constant 1 : index
    %c0_52 = arith.constant 0 : index
    %c0_53 = arith.constant 0 : index
    %c0_54 = arith.constant 0 : index
    %71 = vector.load %arg4[%c1_51, %c0_52, %c0_53, %c0_54] : memref<2x4x1x512xf32, #tpu.memory_space<vmem>>, vector<1x1x1x512xf32>
    %72 = vector.shape_cast %71 : vector<1x1x1x512xf32> to vector<1x512xf32>
    %c1_55 = arith.constant 1 : index
    %c1_56 = arith.constant 1 : index
    %c0_57 = arith.constant 0 : index
    %c0_58 = arith.constant 0 : index
    %73 = vector.load %arg4[%c1_55, %c1_56, %c0_57, %c0_58] : memref<2x4x1x512xf32, #tpu.memory_space<vmem>>, vector<1x1x1x512xf32>
    %74 = vector.shape_cast %73 : vector<1x1x1x512xf32> to vector<1x512xf32>
    %c1_59 = arith.constant 1 : index
    %c2_60 = arith.constant 2 : index
    %c0_61 = arith.constant 0 : index
    %c0_62 = arith.constant 0 : index
    %75 = vector.load %arg4[%c1_59, %c2_60, %c0_61, %c0_62] : memref<2x4x1x512xf32, #tpu.memory_space<vmem>>, vector<1x1x1x512xf32>
    %76 = vector.shape_cast %75 : vector<1x1x1x512xf32> to vector<1x512xf32>
    %c1_63 = arith.constant 1 : index
    %c3_64 = arith.constant 3 : index
    %c0_65 = arith.constant 0 : index
    %c0_66 = arith.constant 0 : index
    %77 = vector.load %arg4[%c1_63, %c3_64, %c0_65, %c0_66] : memref<2x4x1x512xf32, #tpu.memory_space<vmem>>, vector<1x1x1x512xf32>
    %78 = vector.shape_cast %77 : vector<1x1x1x512xf32> to vector<1x512xf32>
    %c0_67 = arith.constant 0 : index
    %c0_68 = arith.constant 0 : index
    %79 = memref.load %arg2[%c0_67, %c0_68] : memref<3x4xf32, #tpu.memory_space<smem>>
    %80 = vector.broadcast %79 : f32 to vector<1x512xf32>
    %81 = arith.mulf %72, %80 : vector<1x512xf32>
    %c0_69 = arith.constant 0 : index
    %c1_70 = arith.constant 1 : index
    %82 = memref.load %arg2[%c0_69, %c1_70] : memref<3x4xf32, #tpu.memory_space<smem>>
    %83 = vector.broadcast %82 : f32 to vector<1x512xf32>
    %84 = arith.mulf %74, %83 : vector<1x512xf32>
    %85 = arith.addf %81, %84 : vector<1x512xf32>
    %c0_71 = arith.constant 0 : index
    %c2_72 = arith.constant 2 : index
    %86 = memref.load %arg2[%c0_71, %c2_72] : memref<3x4xf32, #tpu.memory_space<smem>>
    %87 = vector.broadcast %86 : f32 to vector<1x512xf32>
    %88 = arith.mulf %76, %87 : vector<1x512xf32>
    %89 = arith.addf %85, %88 : vector<1x512xf32>
    %c0_73 = arith.constant 0 : index
    %c3_74 = arith.constant 3 : index
    %90 = memref.load %arg2[%c0_73, %c3_74] : memref<3x4xf32, #tpu.memory_space<smem>>
    %91 = vector.broadcast %90 : f32 to vector<1x512xf32>
    %92 = arith.mulf %78, %91 : vector<1x512xf32>
    %93 = arith.addf %89, %92 : vector<1x512xf32>
    %c0_75 = arith.constant 0 : index
    %94 = memref.load %arg3[%c0_75] : memref<3xf32, #tpu.memory_space<smem>>
    %95 = vector.broadcast %94 : f32 to vector<1x512xf32>
    %96 = arith.addf %93, %95 : vector<1x512xf32>
    %c1_76 = arith.constant 1 : index
    %c0_77 = arith.constant 0 : index
    %c0_78 = arith.constant 0 : index
    %c0_79 = arith.constant 0 : index
    %97 = vector.load %arg5[%c1_76, %c0_77, %c0_78, %c0_79] : memref<2x3x1x512xf32, #tpu.memory_space<vmem>>, vector<1x1x1x512xf32>
    %98 = vector.shape_cast %97 : vector<1x1x1x512xf32> to vector<1x512xf32>
    %99 = vector.shape_cast %96 : vector<1x512xf32> to vector<1x1x1x512xf32>
    tpu.vector_store %arg5[%c1_76, %c0_77, %c0_78, %c0_79], %99 {strides = array<i32>} : memref<2x3x1x512xf32, #tpu.memory_space<vmem>>, vector<1x1x1x512xf32>,
    %c1_80 = arith.constant 1 : index
    %c0_81 = arith.constant 0 : index
    %100 = memref.load %arg2[%c1_80, %c0_81] : memref<3x4xf32, #tpu.memory_space<smem>>
    %101 = vector.broadcast %100 : f32 to vector<1x512xf32>
    %102 = arith.mulf %72, %101 : vector<1x512xf32>
    %c1_82 = arith.constant 1 : index
    %c1_83 = arith.constant 1 : index
    %103 = memref.load %arg2[%c1_82, %c1_83] : memref<3x4xf32, #tpu.memory_space<smem>>
    %104 = vector.broadcast %103 : f32 to vector<1x512xf32>
    %105 = arith.mulf %74, %104 : vector<1x512xf32>
    %106 = arith.addf %102, %105 : vector<1x512xf32>
    %c1_84 = arith.constant 1 : index
    %c2_85 = arith.constant 2 : index
    %107 = memref.load %arg2[%c1_84, %c2_85] : memref<3x4xf32, #tpu.memory_space<smem>>
    %108 = vector.broadcast %107 : f32 to vector<1x512xf32>
    %109 = arith.mulf %76, %108 : vector<1x512xf32>
    %110 = arith.addf %106, %109 : vector<1x512xf32>
    %c1_86 = arith.constant 1 : index
    %c3_87 = arith.constant 3 : index
    %111 = memref.load %arg2[%c1_86, %c3_87] : memref<3x4xf32, #tpu.memory_space<smem>>
    %112 = vector.broadcast %111 : f32 to vector<1x512xf32>
    %113 = arith.mulf %78, %112 : vector<1x512xf32>
    %114 = arith.addf %110, %113 : vector<1x512xf32>
    %c1_88 = arith.constant 1 : index
    %115 = memref.load %arg3[%c1_88] : memref<3xf32, #tpu.memory_space<smem>>
    %116 = vector.broadcast %115 : f32 to vector<1x512xf32>
    %117 = arith.addf %114, %116 : vector<1x512xf32>
    %c1_89 = arith.constant 1 : index
    %c1_90 = arith.constant 1 : index
    %c0_91 = arith.constant 0 : index
    %c0_92 = arith.constant 0 : index
    %118 = vector.load %arg5[%c1_89, %c1_90, %c0_91, %c0_92] : memref<2x3x1x512xf32, #tpu.memory_space<vmem>>, vector<1x1x1x512xf32>
    %119 = vector.shape_cast %118 : vector<1x1x1x512xf32> to vector<1x512xf32>
    %120 = vector.shape_cast %117 : vector<1x512xf32> to vector<1x1x1x512xf32>
    tpu.vector_store %arg5[%c1_89, %c1_90, %c0_91, %c0_92], %120 {strides = array<i32>} : memref<2x3x1x512xf32, #tpu.memory_space<vmem>>, vector<1x1x1x512xf32>,
    %c2_93 = arith.constant 2 : index
    %c0_94 = arith.constant 0 : index
    %121 = memref.load %arg2[%c2_93, %c0_94] : memref<3x4xf32, #tpu.memory_space<smem>>
    %122 = vector.broadcast %121 : f32 to vector<1x512xf32>
    %123 = arith.mulf %72, %122 : vector<1x512xf32>
    %c2_95 = arith.constant 2 : index
    %c1_96 = arith.constant 1 : index
    %124 = memref.load %arg2[%c2_95, %c1_96] : memref<3x4xf32, #tpu.memory_space<smem>>
    %125 = vector.broadcast %124 : f32 to vector<1x512xf32>
    %126 = arith.mulf %74, %125 : vector<1x512xf32>
    %127 = arith.addf %123, %126 : vector<1x512xf32>
    %c2_97 = arith.constant 2 : index
    %c2_98 = arith.constant 2 : index
    %128 = memref.load %arg2[%c2_97, %c2_98] : memref<3x4xf32, #tpu.memory_space<smem>>
    %129 = vector.broadcast %128 : f32 to vector<1x512xf32>
    %130 = arith.mulf %76, %129 : vector<1x512xf32>
    %131 = arith.addf %127, %130 : vector<1x512xf32>
    %c2_99 = arith.constant 2 : index
    %c3_100 = arith.constant 3 : index
    %132 = memref.load %arg2[%c2_99, %c3_100] : memref<3x4xf32, #tpu.memory_space<smem>>
    %133 = vector.broadcast %132 : f32 to vector<1x512xf32>
    %134 = arith.mulf %78, %133 : vector<1x512xf32>
    %135 = arith.addf %131, %134 : vector<1x512xf32>
    %c2_101 = arith.constant 2 : index
    %136 = memref.load %arg3[%c2_101] : memref<3xf32, #tpu.memory_space<smem>>
    %137 = vector.broadcast %136 : f32 to vector<1x512xf32>
    %138 = arith.addf %135, %137 : vector<1x512xf32>
    %c1_102 = arith.constant 1 : index
    %c2_103 = arith.constant 2 : index
    %c0_104 = arith.constant 0 : index
    %c0_105 = arith.constant 0 : index
    %139 = vector.load %arg5[%c1_102, %c2_103, %c0_104, %c0_105] : memref<2x3x1x512xf32, #tpu.memory_space<vmem>>, vector<1x1x1x512xf32>
    %140 = vector.shape_cast %139 : vector<1x1x1x512xf32> to vector<1x512xf32>
    %141 = vector.shape_cast %138 : vector<1x512xf32> to vector<1x1x1x512xf32>
    tpu.vector_store %arg5[%c1_102, %c2_103, %c0_104, %c0_105], %141 {strides = array<i32>} : memref<2x3x1x512xf32, #tpu.memory_space<vmem>>, vector<1x1x1x512xf32>,
    return
  }
  func.func @transform_0(%arg0: i32, %arg1: i32) -> (i32, i32) {
    %c0_i32 = arith.constant 0 : i32
    %c0_i32_0 = arith.constant 0 : i32
    %c0_i32_1 = arith.constant 0 : i32
    return %c0_i32, %c0_i32_0 : i32, i32
  }
  func.func @transform_1(%arg0: i32, %arg1: i32) -> i32 {
    %c0_i32 = arith.constant 0 : i32
    %c0_i32_0 = arith.constant 0 : i32
    return %c0_i32 : i32
  }
  func.func @transform_2(%arg0: i32, %arg1: i32) -> (i32, i32, i32, i32) {
    %c0_i32 = arith.constant 0 : i32
    %c0_i32_0 = arith.constant 0 : i32
    %c0_i32_1 = arith.constant 0 : i32
    return %arg0, %c0_i32, %arg1, %c0_i32_0 : i32, i32, i32, i32
  }
  func.func @transform_3(%arg0: i32, %arg1: i32) -> (i32, i32, i32, i32) {
    %c0_i32 = arith.constant 0 : i32
    %c0_i32_0 = arith.constant 0 : i32
    %c0_i32_1 = arith.constant 0 : i32
    return %arg0, %c0_i32, %arg1, %c0_i32_0 : i32, i32, i32, i32
  }
}

</mosaic_0001>

<llo_original>
// kernel: tpu_custom_call.1
$region0: #{tpu_custom_call.1}
  #allocation0 [shape = 'u32[]', space=smem, size = 0x4, offset = 0x4, fixed_abs, tag = 'smem constant byte address 0x4 - core index']
  #allocation1 [shape = 'u32[144,128]{1,0:T(1,128)}', space=vmem, size = 0x12000, scoped, tag = 'internal scratch']
  %s0 = inlined_call_operand.hbm [shape: f32[3,4], index: 0, kind: input, shape index: {}]
  %s1 = inlined_call_operand.vmem [shape: f32[3], index: 1, kind: input, shape index: {}]
  %s2 = inlined_call_operand.hbm [shape: f32[2,4,1,512], index: 2, kind: input, shape index: {}]
  %s3 = inlined_call_operand.hbm [shape: f32[2,3,1,512], index: 3, kind: output, shape index: {}]
  %s4 = sld [smem:[#allocation0]]
  $region34: #{tpu_custom_call.1} parent=0
    _
  %s6 = ssub.s32 1, %s4
  %s7 = scalar_select 0, %s6, %s4
  $region1: #{tpu_custom_call.1} parent=0
    #allocation2 [shape = 'u8[2048]{0}', space=smem, size = 0x800, scoped, tag = 'input window, operand 0, single buffered']
    #allocation3 [shape = 's32[1]{0}', space=sflag, size = 0x4, scoped, tag = 'scoped memory for tpu_custom_call.1']
    #allocation4 [shape = 's32[1]{0}', space=sflag, size = 0x4, scoped, tag = 'scoped memory for tpu_custom_call.1']
    #allocation5 [shape = 's32[1]{0}', space=sflag, size = 0x4, scoped, tag = 'scoped memory for tpu_custom_call.1']
    #allocation6 [shape = 's32[1]{0}', space=sflag, size = 0x4, scoped, tag = 'scoped memory for tpu_custom_call.1']
    #allocation7 [shape = 'u8[512]{0}', space=smem, size = 0x200, scoped, tag = 'input window, operand 1, single buffered']
    #allocation8 [shape = 'u8[16384]{0}', space=vmem, size = 0x4000, scoped, tag = 'input window, operand 2, single buffered']
    #allocation9 [shape = 'u8[12288]{0}', space=vmem, size = 0x3000, scoped, tag = 'output window, operand 0, single buffered']
    %8 = vsyncpa [#allocation5], 0
    %9 = vsyncpa [#allocation6], 0
    %10 = vsyncpa [#allocation3], 0
    %11 = vsyncpa [#allocation4], 0
    // Predicated region
    $region2: #{tpu_custom_call.1} parent=1 // pred_check
      _
    $region3: #{tpu_custom_call.1} parent=1 // pred_check_branch
      %13 = sbr.rel (0) target = $region5
    $region4: #{tpu_custom_call.1} parent=1 // pred_region
      %s15 = ssub.s32 64, 64
      %16 = vsyncadd [#allocation5], %s15
      %19 = dma.hbm_to_smem %s0, 64, [#allocation2], [#allocation5]
    $region5: #{tpu_custom_call.1} parent=1 // pred_fallthru
      _
    // Predicated region
    $region6: #{tpu_custom_call.1} parent=1 // pred_check
      _
    $region7: #{tpu_custom_call.1} parent=1 // pred_check_branch
      %21 = sbr.rel (0) target = $region9
    $region8: #{tpu_custom_call.1} parent=1 // pred_region
      %s23 = ssub.s32 16, 16
      %24 = vsyncadd [#allocation6], %s23
      %s26 = sshll.u32 %s1, 4
      %s27 = int_to_ptr.vmem [resolvable:$true] %s26
      %29 = dma.vmem_to_smem %s27, 16, [#allocation7], [#allocation6]
    $region9: #{tpu_custom_call.1} parent=1 // pred_fallthru
      _
    // Predicated region
    $region10: #{tpu_custom_call.1} parent=1 // pred_check
      _
    $region11: #{tpu_custom_call.1} parent=1 // pred_check_branch
      %31 = sbr.rel (0) target = $region13
    $region12: #{tpu_custom_call.1} parent=1 // pred_region
      %s33 = ssub.s32 512, 512
      %34 = vsyncadd [#allocation3], %s33
      %s35 = sshll.u32 [#allocation8], 4
      %s36 = int_to_ptr.vmem [resolvable:$true] %s35
      %41 = dma.hbm_to_vmem [thread:$0]  %s2, 512, %s36, [#allocation3], 64, 64, 4
    $region13: #{tpu_custom_call.1} parent=1 // pred_fallthru
      _
    // Predicated region
    $region14: #{tpu_custom_call.1} parent=1 // pred_check
      _
    $region15: #{tpu_custom_call.1} parent=1 // pred_check_branch
      %43 = sbr.rel (0) target = $region17
    $region16: #{tpu_custom_call.1} parent=1 // pred_region
      %44 = dma.done [#allocation5], 64
    $region17: #{tpu_custom_call.1} parent=1 // pred_fallthru
      _
    // Predicated region
    $region18: #{tpu_custom_call.1} parent=1 // pred_check
      _
    $region19: #{tpu_custom_call.1} parent=1 // pred_check_branch
      %46 = sbr.rel (0) target = $region21
    $region20: #{tpu_custom_call.1} parent=1 // pred_region
      %47 = dma.done [#allocation6], 16
    $region21: #{tpu_custom_call.1} parent=1 // pred_fallthru
      _
    // Predicated region
    $region22: #{tpu_custom_call.1} parent=1 // pred_check
      _
    $region23: #{tpu_custom_call.1} parent=1 // pred_check_branch
      %49 = sbr.rel (0) target = $region25
    $region24: #{tpu_custom_call.1} parent=1 // pred_region
      %50 = dma.done [#allocation3], 512
    $region25: #{tpu_custom_call.1} parent=1 // pred_fallthru
      _
    %51 = sfence
    %v52 = vld [vmem:[#allocation8] sm:$0xf]
    %s53 = scalar_lea.vmem [#allocation8], 4
    %v54 = vld [vmem:[%s53] sm:$0xf]
    %s55 = scalar_lea.vmem [#allocation8], 8
    %v56 = vld [vmem:[%s55] sm:$0xf]
    %s57 = scalar_lea.vmem [#allocation8], 12
    %v58 = vld [vmem:[%s57] sm:$0xf]
    %s59 = sld [smem:[#allocation2]]
    %v60 = vstv %s59
    %v61 = vmul.f32 %v52, %v60
    %s62 = sld [smem:[#allocation2 + $0x1]]
    %v63 = vstv %s62
    %v64 = vmul.f32 %v54, %v63
    %v65 = vadd.f32 %v61, %v64
    %s66 = sld [smem:[#allocation2 + $0x2]]
    %v67 = vstv %s66
    %v68 = vmul.f32 %v56, %v67
    %v69 = vadd.f32 %v65, %v68
    %s70 = sld [smem:[#allocation2 + $0x3]]
    %v71 = vstv %s70
    %v72 = vmul.f32 %v58, %v71
    %v73 = vadd.f32 %v69, %v72
    %s74 = sld [smem:[#allocation7]]
    %v75 = vstv %s74
    %v76 = vadd.f32 %v73, %v75
    %v77 = vlaneseq
    %vm78 = vcmp.ge.s32.totalorder %v77, 0
    %vm79 = vcmp.lt.s32.totalorder %v77, 512
    %vm80 = vmand %vm78, %vm79
    %81 = vst.msk [vmem:[#allocation9] sm:$0xf] %vm80, %v76
    %s82 = sld [smem:[#allocation2 + $0x80]]
    %v83 = vstv %s82
    %v84 = vmul.f32 %v52, %v83
    %s85 = sld [smem:[#allocation2 + $0x81]]
    %v86 = vstv %s85
    %v87 = vmul.f32 %v54, %v86
    %v88 = vadd.f32 %v84, %v87
    %s89 = sld [smem:[#allocation2 + $0x82]]
    %v90 = vstv %s89
    %v91 = vmul.f32 %v56, %v90
    %v92 = vadd.f32 %v88, %v91
    %s93 = sld [smem:[#allocation2 + $0x83]]
    %v94 = vstv %s93
    %v95 = vmul.f32 %v58, %v94
    %v96 = vadd.f32 %v92, %v95
    %s97 = sld [smem:[#allocation7 + $0x1]]
    %v98 = vstv %s97
    %v99 = vadd.f32 %v96, %v98
    %s100 = scalar_lea.vmem [#allocation9], 4
    %101 = vst.msk [vmem:[%s100] sm:$0xf] %vm80, %v99
    %s102 = sld [smem:[#allocation2 + $0x100]]
    %v103 = vstv %s102
    %v104 = vmul.f32 %v52, %v103
    %s105 = sld [smem:[#allocation2 + $0x101]]
    %v106 = vstv %s105
    %v107 = vmul.f32 %v54, %v106
    %v108 = vadd.f32 %v104, %v107
    %s109 = sld [smem:[#allocation2 + $0x102]]
    %v110 = vstv %s109
    %v111 = vmul.f32 %v56, %v110
    %v112 = vadd.f32 %v108, %v111
    %s113 = sld [smem:[#allocation2 + $0x103]]
    %v114 = vstv %s113
    %v115 = vmul.f32 %v58, %v114
    %v116 = vadd.f32 %v112, %v115
    %s117 = sld [smem:[#allocation7 + $0x2]]
    %v118 = vstv %s117
    %v119 = vadd.f32 %v116, %v118
    %s120 = scalar_lea.vmem [#allocation9], 8
    %121 = vst.msk [vmem:[%s120] sm:$0xf] %vm80, %v119
    %s122 = scalar_lea.vmem [#allocation8], 16
    %v123 = vld [vmem:[%s122] sm:$0xf]
    %s124 = scalar_lea.vmem [#allocation8], 20
    %v125 = vld [vmem:[%s124] sm:$0xf]
    %s126 = scalar_lea.vmem [#allocation8], 24
    %v127 = vld [vmem:[%s126] sm:$0xf]
    %s128 = scalar_lea.vmem [#allocation8], 28
    %v129 = vld [vmem:[%s128] sm:$0xf]
    %s130 = sld [smem:[#allocation2]]
    %v131 = vstv %s130
    %v132 = vmul.f32 %v123, %v131
    %s133 = sld [smem:[#allocation2 + $0x1]]
    %v134 = vstv %s133
    %v135 = vmul.f32 %v125, %v134
    %v136 = vadd.f32 %v132, %v135
    %s137 = sld [smem:[#allocation2 + $0x2]]
    %v138 = vstv %s137
    %v139 = vmul.f32 %v127, %v138
    %v140 = vadd.f32 %v136, %v139
    %s141 = sld [smem:[#allocation2 + $0x3]]
    %v142 = vstv %s141
    %v143 = vmul.f32 %v129, %v142
    %v144 = vadd.f32 %v140, %v143
    %s145 = sld [smem:[#allocation7]]
    %v146 = vstv %s145
    %v147 = vadd.f32 %v144, %v146
    %s148 = scalar_lea.vmem [#allocation9], 12
    %149 = vst.msk [vmem:[%s148] sm:$0xf] %vm80, %v147
    %s150 = sld [smem:[#allocation2 + $0x80]]
    %v151 = vstv %s150
    %v152 = vmul.f32 %v123, %v151
    %s153 = sld [smem:[#allocation2 + $0x81]]
    %v154 = vstv %s153
    %v155 = vmul.f32 %v125, %v154
    %v156 = vadd.f32 %v152, %v155
    %s157 = sld [smem:[#allocation2 + $0x82]]
    %v158 = vstv %s157
    %v159 = vmul.f32 %v127, %v158
    %v160 = vadd.f32 %v156, %v159
    %s161 = sld [smem:[#allocation2 + $0x83]]
    %v162 = vstv %s161
    %v163 = vmul.f32 %v129, %v162
    %v164 = vadd.f32 %v160, %v163
    %s165 = sld [smem:[#allocation7 + $0x1]]
    %v166 = vstv %s165
    %v167 = vadd.f32 %v164, %v166
    %s168 = scalar_lea.vmem [#allocation9], 16
    %169 = vst.msk [vmem:[%s168] sm:$0xf] %vm80, %v167
    %s170 = sld [smem:[#allocation2 + $0x100]]
    %v171 = vstv %s170
    %v172 = vmul.f32 %v123, %v171
    %s173 = sld [smem:[#allocation2 + $0x101]]
    %v174 = vstv %s173
    %v175 = vmul.f32 %v125, %v174
    %v176 = vadd.f32 %v172, %v175
    %s177 = sld [smem:[#allocation2 + $0x102]]
    %v178 = vstv %s177
    %v179 = vmul.f32 %v127, %v178
    %v180 = vadd.f32 %v176, %v179
    %s181 = sld [smem:[#allocation2 + $0x103]]
    %v182 = vstv %s181
    %v183 = vmul.f32 %v129, %v182
    %v184 = vadd.f32 %v180, %v183
    %s185 = sld [smem:[#allocation7 + $0x2]]
    %v186 = vstv %s185
    %v187 = vadd.f32 %v184, %v186
    %s188 = scalar_lea.vmem [#allocation9], 20
    %189 = vst.msk [vmem:[%s188] sm:$0xf] %vm80, %v187
    // Predicated region
    $region26: #{tpu_custom_call.1} parent=1 // pred_check
      _
    $region27: #{tpu_custom_call.1} parent=1 // pred_check_branch
      %191 = sbr.rel (0) target = $region29
    $region28: #{tpu_custom_call.1} parent=1 // pred_region
      %s193 = ssub.s32 384, 384
      %194 = vsyncadd [#allocation4], %s193
      %s195 = sshll.u32 [#allocation9], 4
      %s196 = int_to_ptr.vmem [resolvable:$true] %s195
      %201 = dma.vmem_to_hbm [thread:$0]  %s196, 384, %s3, [#allocation4], 64, 64, 4
    $region29: #{tpu_custom_call.1} parent=1 // pred_fallthru
      _
    // Predicated region
    $region30: #{tpu_custom_call.1} parent=1 // pred_check
      _
    $region31: #{tpu_custom_call.1} parent=1 // pred_check_branch
      %203 = sbr.rel (0) target = $region33
    $region32: #{tpu_custom_call.1} parent=1 // pred_region
      %204 = dma.done [#allocation4], 384
    $region33: #{tpu_custom_call.1} parent=1 // pred_fallthru
      _
    %205 = vsyncpa [#allocation3], 1
    %206 = vsyncpa [#allocation4], 1
    %207 = vsyncpa [#allocation5], 1
    %208 = vsyncpa [#allocation6], 1

</llo_original>
